<compile_context>
chip_gen: v7x
topology: tpu7x:2x2x1
jax: 0.10.0
libtpu: 0.0.40
codegen_flags: <defaults>
</compile_context>

<pallas_src>
import jax
import jax.numpy as jnp
from jax.experimental import pallas as pl
from jax.experimental.pallas import tpu as pltpu

EPS = 1e-6


def conv_layernorm_kernel(x_ref, a_ref, b_ref, o_ref):
    # x_ref / o_ref / a_ref / b_ref: (1, C, TILE_HW) blocks (a/b already lane-broadcast).
    x = x_ref[...].astype(jnp.float32)                    # (1, C, T)
    mean = jnp.mean(x, axis=1, keepdims=True)             # (1, 1, T)  cross-sublane (XLU)
    dif = x - mean
    var = jnp.mean(dif * dif, axis=1, keepdims=True)      # (1, 1, T)
    inv = jax.lax.rsqrt(var + EPS)                        # EUP slot (free vs VALU)
    # Fused normalize + affine, single full-width store.
    o_ref[...] = (dif * inv * a_ref[...] + b_ref[...]).astype(o_ref.dtype)


def _round_up(v, m):
    return ((v + m - 1) // m) * m


def _chip_budgets():
    """Per-generation (block byte target, baseline vmem limit, physical vmem)."""
    vmem_cap = 128 * 1024 * 1024
    try:
        info = pltpu.get_tpu_info()
        vmem_cap = int(getattr(info, "vmem_capacity_bytes", vmem_cap))
    except Exception:
        pass
    if vmem_cap <= 64 * 1024 * 1024:
        # v7x: 64 MiB VMEM / TensorCore -> ~3 MiB working set, ~40 MiB scoped limit.
        return 3 * 1024 * 1024, 40 * 1024 * 1024, vmem_cap
    # v5e / v6e: 128 MiB VMEM -> bigger tiles amortize the ~0.35 us per-grid-step cost.
    return 8 * 1024 * 1024, 96 * 1024 * 1024, vmem_cap


def _pick_tile_hw(hw_pad, c, x_dtype, n_batch, target_bytes):
    """Largest 128-multiple divisor of hw_pad whose VMEM working set ~= target_bytes.

    Returns (tile_hw, estimated working-set bytes).  hw_pad must be a multiple of 128.
    """
    in_bytes = jnp.dtype(x_dtype).itemsize
    # Sublane padding of C: f32 -> 8, 2-byte dtypes -> 16, 1-byte -> 32.
    sublane_io = max(8, 32 // max(1, in_bytes))
    c_io = _round_up(c, sublane_io)          # effective C for x-dtype in/out blocks
    c_f32 = _round_up(c, 8)                  # effective C for f32 a/b and temporaries
    # Per-lane bytes: double-buffered in+out (x.dtype) + resident a/b + two f32 temps.
    bytes_per_lane = 4 * c_io * in_bytes + 4 * c_f32 * 4
    t = (target_bytes // bytes_per_lane) // 128 * 128
    t = max(128, min(t, hw_pad))
    while hw_pad % t != 0:                   # terminates: 128 always divides hw_pad
        t -= 128
    # Keep >= ~8 total grid steps so the pipeline (and v7x's 2 TensorCores) stay busy.
    want_tiles = -(-8 // max(1, n_batch))    # ceil(8 / N)
    t_steps = (hw_pad // want_tiles) // 128 * 128
    if t_steps >= 128:
        while hw_pad % t_steps != 0:
            t_steps -= 128
        t = min(t, t_steps)
    return t, bytes_per_lane * t


def conv_layer_norm(x, a, b):
    """x: (N, C, H, W); a, b: (C, 1, 1) scale/bias (as in the torch module)."""
    N, C, H, W = x.shape
    HW = H * W
    HW_pad = _round_up(HW, 128)

    x3 = x.reshape(N, C, HW)                                  # contiguous reshape, free
    if HW_pad != HW:
        # Zero-pad the lane axis; channel stats are per-lane so padding is inert.
        x3 = jnp.pad(x3, ((0, 0), (0, 0), (0, HW_pad - HW)))

    target_bytes, gen_limit, vmem_cap = _chip_budgets()
    tile_hw, est_bytes = _pick_tile_hw(HW_pad, C, x.dtype, N, target_bytes)
    grid = (N, HW_pad // tile_hw)

    # Lane-full scale/shift: loaded once (constant block index), resident thereafter.
    a3 = jnp.broadcast_to(jnp.asarray(a, jnp.float32).reshape(1, C, 1), (1, C, tile_hw))
    b3 = jnp.broadcast_to(jnp.asarray(b, jnp.float32).reshape(1, C, 1), (1, C, tile_hw))

    vmem_limit = int(min(max(gen_limit, est_bytes + (4 << 20)), vmem_cap - (16 << 20)))

    out3 = pl.pallas_call(
        conv_layernorm_kernel,
        out_shape=jax.ShapeDtypeStruct((N, C, HW_pad), x.dtype),
        grid_spec=pltpu.PrefetchScalarGridSpec(
            num_scalar_prefetch=0,
            grid=grid,
            in_specs=[
                pl.BlockSpec((1, C, tile_hw), lambda n, t: (n, 0, t)),
                pl.BlockSpec((1, C, tile_hw), lambda n, t: (0, 0, 0)),
                pl.BlockSpec((1, C, tile_hw), lambda n, t: (0, 0, 0)),
            ],
            out_specs=pl.BlockSpec((1, C, tile_hw), lambda n, t: (n, 0, t)),
        ),
        compiler_params=pltpu.CompilerParams(
            dimension_semantics=("parallel", "parallel"),
            vmem_limit_bytes=vmem_limit,
        ),
    )(x3, a3, b3)

    if HW_pad != HW:
        out3 = out3[:, :, :HW]
    return out3.reshape(N, C, H, W)


def conv_layer_norm_ref(x, a, b):
    # Pure-JAX reference mirroring the PyTorch forward exactly.
    mean = jnp.mean(x, axis=1, keepdims=True)
    dif = x - mean
    var = jnp.mean(dif * dif, axis=1, keepdims=True)
    xn = dif / jnp.sqrt(var + EPS)
    return a.reshape(1, -1, 1, 1) * xn + b.reshape(1, -1, 1, 1)


if __name__ == "__main__":
    key = jax.random.PRNGKey(0)
    N, C, H, W = 2, 4, 16, 16
    x = jax.random.normal(key, (N, C, H, W), dtype=jnp.float32)

    # Parameters exactly as in the module __init__: a = ones(dim,1,1), b = zeros(dim,1,1)
    a = jnp.ones((C, 1, 1), dtype=jnp.float32)
    b = jnp.zeros((C, 1, 1), dtype=jnp.float32)

    out = conv_layer_norm(x, a, b)
    out = jax.block_until_ready(out)

    ref = conv_layer_norm_ref(x, a, b)
    assert out.shape == (N, C, H, W)
    assert jnp.allclose(out, ref, atol=1e-5, rtol=1e-5)

    print("KERNEL_OK")
</pallas_src>

<mosaic_0001>
module attributes {stable_mosaic.version = 11 : i64} {
  func.func @conv_layernorm_kernel(%arg0: i32, %arg1: i32, %arg2: memref<1x4x256xf32, #tpu.memory_space<vmem>>, %arg3: memref<1x4x256xf32, #tpu.memory_space<vmem>>, %arg4: memref<1x4x256xf32, #tpu.memory_space<vmem>>, %arg5: memref<1x4x256xf32, #tpu.memory_space<vmem>>) attributes {dimension_semantics = [#tpu.dimension_semantics<parallel>, #tpu.dimension_semantics<parallel>], iteration_bounds = array<i64: 2, 1>, scalar_prefetch = 0 : i64, scratch_operands = 0 : i64, tpu.core_type = #tpu.core_type<tc>, window_params = [{transform_indices = @transform_0, window_bounds = array<i64: 1, 4, 256>}, {pipeline_mode = #tpu.pipeline_mode<synchronous>, transform_indices = @transform_1, window_bounds = array<i64: 1, 4, 256>}, {pipeline_mode = #tpu.pipeline_mode<synchronous>, transform_indices = @transform_2, window_bounds = array<i64: 1, 4, 256>}, {transform_indices = @transform_3, window_bounds = array<i64: 1, 4, 256>}]} {
    %c0 = arith.constant 0 : index
    %c0_0 = arith.constant 0 : index
    %c0_1 = arith.constant 0 : index
    %0 = vector.load %arg2[%c0, %c0_0, %c0_1] : memref<1x4x256xf32, #tpu.memory_space<vmem>>, vector<1x4x256xf32>
    %cst = arith.constant dense<0.000000e+00> : vector<1x256xf32>
    %1 = vector.multi_reduction <add>, %0, %cst [1] : vector<1x4x256xf32> to vector<1x256xf32>
    %2 = vector.shape_cast %1 : vector<1x256xf32> to vector<1x1x256xf32>
    %cst_2 = arith.constant 4.000000e+00 : f32
    %3 = vector.broadcast %cst_2 : f32 to vector<1x1x256xf32>
    %4 = arith.divf %2, %3 : vector<1x1x256xf32>
    %5 = vector.broadcast %4 : vector<1x1x256xf32> to vector<1x4x256xf32>
    %6 = arith.subf %0, %5 : vector<1x4x256xf32>
    %7 = arith.mulf %6, %6 : vector<1x4x256xf32>
    %cst_3 = arith.constant dense<0.000000e+00> : vector<1x256xf32>
    %8 = vector.multi_reduction <add>, %7, %cst_3 [1] : vector<1x4x256xf32> to vector<1x256xf32>
    %9 = vector.shape_cast %8 : vector<1x256xf32> to vector<1x1x256xf32>
    %cst_4 = arith.constant 4.000000e+00 : f32
    %10 = vector.broadcast %cst_4 : f32 to vector<1x1x256xf32>
    %11 = arith.divf %9, %10 : vector<1x1x256xf32>
    %cst_5 = arith.constant 9.99999997E-7 : f32
    %12 = vector.broadcast %cst_5 : f32 to vector<1x1x256xf32>
    %13 = arith.addf %11, %12 : vector<1x1x256xf32>
    %14 = math.rsqrt %13 : vector<1x1x256xf32>
    %15 = vector.broadcast %14 : vector<1x1x256xf32> to vector<1x4x256xf32>
    %16 = arith.mulf %6, %15 : vector<1x4x256xf32>
    %c0_6 = arith.constant 0 : index
    %c0_7 = arith.constant 0 : index
    %c0_8 = arith.constant 0 : index
    %17 = vector.load %arg3[%c0_6, %c0_7, %c0_8] : memref<1x4x256xf32, #tpu.memory_space<vmem>>, vector<1x4x256xf32>
    %18 = arith.mulf %16, %17 : vector<1x4x256xf32>
    %c0_9 = arith.constant 0 : index
    %c0_10 = arith.constant 0 : index
    %c0_11 = arith.constant 0 : index
    %19 = vector.load %arg4[%c0_9, %c0_10, %c0_11] : memref<1x4x256xf32, #tpu.memory_space<vmem>>, vector<1x4x256xf32>
    %20 = arith.addf %18, %19 : vector<1x4x256xf32>
    %c0_12 = arith.constant 0 : index
    %c0_13 = arith.constant 0 : index
    %c0_14 = arith.constant 0 : index
    %21 = vector.load %arg5[%c0_12, %c0_13, %c0_14] : memref<1x4x256xf32, #tpu.memory_space<vmem>>, vector<1x4x256xf32>
    tpu.vector_store %arg5[%c0_12, %c0_13, %c0_14], %20 {strides = array<i32>} : memref<1x4x256xf32, #tpu.memory_space<vmem>>, vector<1x4x256xf32>,
    return
  }
  func.func @transform_0(%arg0: i32, %arg1: i32) -> (i32, i32, i32) {
    %c0_i32 = arith.constant 0 : i32
    %c0_i32_0 = arith.constant 0 : i32
    return %arg0, %c0_i32, %arg1 : i32, i32, i32
  }
  func.func @transform_1(%arg0: i32, %arg1: i32) -> (i32, i32, i32) {
    %c0_i32 = arith.constant 0 : i32
    %c0_i32_0 = arith.constant 0 : i32
    %c0_i32_1 = arith.constant 0 : i32
    %c0_i32_2 = arith.constant 0 : i32
    return %c0_i32, %c0_i32_0, %c0_i32_1 : i32, i32, i32
  }
  func.func @transform_2(%arg0: i32, %arg1: i32) -> (i32, i32, i32) {
    %c0_i32 = arith.constant 0 : i32
    %c0_i32_0 = arith.constant 0 : i32
    %c0_i32_1 = arith.constant 0 : i32
    %c0_i32_2 = arith.constant 0 : i32
    return %c0_i32, %c0_i32_0, %c0_i32_1 : i32, i32, i32
  }
  func.func @transform_3(%arg0: i32, %arg1: i32) -> (i32, i32, i32) {
    %c0_i32 = arith.constant 0 : i32
    %c0_i32_0 = arith.constant 0 : i32
    return %arg0, %c0_i32, %arg1 : i32, i32, i32
  }
}

</mosaic_0001>

<llo_original>
// kernel: tpu_custom_call.1
$region0: #{tpu_custom_call.1}
  #allocation0 [shape = 'u32[]', space=smem, size = 0x4, offset = 0x4, fixed_abs, tag = 'smem constant byte address 0x4 - core index']
  #allocation1 [shape = 'u32[144,128]{1,0:T(1,128)}', space=vmem, size = 0x12000, scoped, tag = 'internal scratch']
  %s0 = inlined_call_operand.hbm [shape: f32[2,4,256], index: 0, kind: input, shape index: {}]
  %s1 = inlined_call_operand.hbm [shape: f32[1,4,256], index: 1, kind: input, shape index: {}]
  %s2 = inlined_call_operand.hbm [shape: f32[1,4,256], index: 2, kind: input, shape index: {}]
  %s3 = inlined_call_operand.hbm [shape: f32[2,4,256], index: 3, kind: output, shape index: {}]
  %s4 = sld [smem:[#allocation0]]
  $region57: #{tpu_custom_call.1} parent=0
    _
  %s6 = ssub.s32 1, %s4
  %s7 = scalar_select 0, %s6, %s4
  $region1: #{tpu_custom_call.1} parent=0
    #allocation2 [shape = 'u8[8192]{0}', space=vmem, size = 0x2000, scoped, tag = 'input window, operand 0']
    #allocation3 [shape = 's32[2]{0}', space=sflag, size = 0x8, scoped, tag = 'scoped memory for tpu_custom_call.1']
    #allocation4 [shape = 's32[2]{0}', space=sflag, size = 0x8, scoped, tag = 'scoped memory for tpu_custom_call.1']
    #allocation5 [shape = 'u8[4096]{0}', space=vmem, size = 0x1000, scoped, tag = 'input window, operand 1, single buffered']
    #allocation6 [shape = 's32[1]{0}', space=sflag, size = 0x4, scoped, tag = 'scoped memory for tpu_custom_call.1']
    #allocation7 [shape = 'u8[4096]{0}', space=vmem, size = 0x1000, scoped, tag = 'input window, operand 2, single buffered']
    #allocation8 [shape = 'u8[8192]{0}', space=vmem, size = 0x2000, scoped, tag = 'output window, operand 0']
    %8 = vsyncpa [#allocation3], 0
    %s9 = scalar_lea.sflag [#allocation3], 1
    %10 = vsyncpa %s9, 0
    %11 = vsyncpa [#allocation6], 0
    %12 = vsyncpa [#allocation4], 0
    %s13 = scalar_lea.sflag [#allocation4], 1
    %14 = vsyncpa %s13, 0
    loop: start=0, step=1, limit=4
    $region2: #{tpu_custom_call.1} parent=1 // loop_pre_header
      _
    $region3: #{tpu_custom_call.1} parent=1 // loop_header
      %s16 = sphi 0, %s20
      %p17 = scmp.ge.s32.totalorder %s16, 4
      %s23 = sphi 0, %s35
      %s24 = sphi 0, %s31
      %s25 = sphi 0, %s23
      %s26 = sphi 0, %s24
      %s27 = sphi 0, %s25
      %s28 = sphi 0, %s26
      %s40 = sphi 0, %s42
      %s43 = sphi 0, %s40
      %s44 = sphi 0, %s43
      %s60 = sphi 0, %s44
      %s64 = sphi 0, %s64
      %s66 = sphi 0, %s64
      %s67 = sphi 0, %s66
      %s81 = sphi 0, %s67
      %s85 = sphi 0, %s85
      %s87 = sphi 0, %s85
      %s88 = sphi 0, %s87
      %s102 = sphi 0, %s88
      %s110 = sphi 0, %s112
      %s113 = sphi 0, %s110
      %s114 = sphi 0, %s113
      %s130 = sphi 0, %s114
    $region4: #{tpu_custom_call.1} parent=1 // loop_header_branch
      %19 = sbr.rel (%p17) target = $region8
    $region5: #{tpu_custom_call.1} parent=1 // loop_body
      %s21 = ssub.s32 %s16, 1
      %s22 = ssub.s32 %s16, 2
      %s29 = sadd.s32 1, %s24
      %p30 = scmp.ge.s32.totalorder %s29, 1
      %s31 = scalar_select %p30, 0, %s29
      %s32 = sadd.s32 1, %s23
      %s33 = scalar_select %p30, %s32, %s23
      %p34 = scmp.ge.s32.totalorder %s33, 2
      %s35 = scalar_select %p34, 0, %s33
      %s36 = ssub.s32 %s23, %s35
      %s37 = ssub.s32 %s24, %s31
      %s38 = sor.u32 %s36, %s37
      %p39 = scmp.eq.s32.totalorder %s38, 0
      %s41 = sadd.s32 %s40, 1
      %s42 = scalar_select %p39, %s40, %s41
      %p45 = pneg %p39
      %p46 = scmp.eq.s32.totalorder %s16, 1
      %p47 = por %p45, %p46
      %p48 = scmp.ne.s32.totalorder %s40, %s43
      %p49 = scmp.eq.s32.totalorder %s16, 0
      %p50 = por %p48, %p49
      %p51 = scmp.ne.s32.totalorder %s40, %s43
      %p52 = scmp.eq.s32.totalorder %s21, 1
      %p53 = por %p51, %p52
      %p54 = scmp.ne.s32.totalorder %s43, %s44
      %p55 = scmp.eq.s32.totalorder %s21, 0
      %p56 = por %p54, %p55
      %p57 = scmp.ne.s32.totalorder %s43, %s44
      %p58 = scmp.eq.s32.totalorder %s22, 1
      %p59 = por %p57, %p58
      %p61 = scmp.ne.s32.totalorder %s44, %s60
      %p62 = scmp.eq.s32.totalorder %s22, 0
      %p63 = por %p61, %p62
      %s65 = sadd.s32 %s64, 1
      %p68 = scmp.eq.s32.totalorder %s16, 1
      %p69 = scmp.ne.s32.totalorder %s64, %s66
      %p70 = scmp.eq.s32.totalorder %s16, 0
      %p71 = por %p69, %p70
      %p72 = scmp.ne.s32.totalorder %s64, %s66
      %p73 = scmp.eq.s32.totalorder %s21, 1
      %p74 = por %p72, %p73
      %p75 = scmp.ne.s32.totalorder %s66, %s67
      %p76 = scmp.eq.s32.totalorder %s21, 0
      %p77 = por %p75, %p76
      %p78 = scmp.ne.s32.totalorder %s66, %s67
      %p79 = scmp.eq.s32.totalorder %s22, 1
      %p80 = por %p78, %p79
      %p82 = scmp.ne.s32.totalorder %s67, %s81
      %p83 = scmp.eq.s32.totalorder %s22, 0
      %p84 = por %p82, %p83
      %s86 = sadd.s32 %s85, 1
      %p89 = scmp.eq.s32.totalorder %s16, 1
      %p90 = scmp.ne.s32.totalorder %s85, %s87
      %p91 = scmp.eq.s32.totalorder %s16, 0
      %p92 = por %p90, %p91
      %p93 = scmp.ne.s32.totalorder %s85, %s87
      %p94 = scmp.eq.s32.totalorder %s21, 1
      %p95 = por %p93, %p94
      %p96 = scmp.ne.s32.totalorder %s87, %s88
      %p97 = scmp.eq.s32.totalorder %s21, 0
      %p98 = por %p96, %p97
      %p99 = scmp.ne.s32.totalorder %s87, %s88
      %p100 = scmp.eq.s32.totalorder %s22, 1
      %p101 = por %p99, %p100
      %p103 = scmp.ne.s32.totalorder %s88, %s102
      %p104 = scmp.eq.s32.totalorder %s22, 0
      %p105 = por %p103, %p104
      %s106 = ssub.s32 %s23, %s35
      %s107 = ssub.s32 %s24, %s31
      %s108 = sor.u32 %s106, %s107
      %p109 = scmp.eq.s32.totalorder %s108, 0
      %s111 = sadd.s32 %s110, 1
      %s112 = scalar_select %p109, %s110, %s111
      %p115 = pneg %p109
      %p116 = scmp.eq.s32.totalorder %s16, 1
      %p117 = por %p115, %p116
      %p118 = scmp.ne.s32.totalorder %s110, %s113
      %p119 = scmp.eq.s32.totalorder %s16, 0
      %p120 = por %p118, %p119
      %p121 = scmp.ne.s32.totalorder %s110, %s113
      %p122 = scmp.eq.s32.totalorder %s21, 1
      %p123 = por %p121, %p122
      %p124 = scmp.ne.s32.totalorder %s113, %s114
      %p125 = scmp.eq.s32.totalorder %s21, 0
      %p126 = por %p124, %p125
      %p127 = scmp.ne.s32.totalorder %s113, %s114
      %p128 = scmp.eq.s32.totalorder %s22, 1
      %p129 = por %p127, %p128
      %p131 = scmp.ne.s32.totalorder %s114, %s130
      %p132 = scmp.eq.s32.totalorder %s22, 0
      %p133 = por %p131, %p132
      %p134 = scmp.le.s32.totalorder 1, %s16
      %p135 = scmp.lt.s32.totalorder %s16, 3
      %p136 = pnand %p134, %p135
      %p137 = pneg %p136
      // Predicated region
      $region9: #{tpu_custom_call.1} parent=5 // pred_check
        _
      $region10: #{tpu_custom_call.1} parent=5 // pred_check_branch
        %139 = sbr.rel (%p136) target = $region12
      $region11: #{tpu_custom_call.1} parent=5 // pred_region
        %s140 = ssub.s32 %s16, 1
        // Predicated region
        $region13: #{tpu_custom_call.1} parent=11 // pred_check
          %p141 = pneg %p77
        $region14: #{tpu_custom_call.1} parent=11 // pred_check_branch
          %143 = sbr.rel (%p141) target = $region16
        $region15: #{tpu_custom_call.1} parent=11 // pred_region
          %s145 = ssub.s32 128, 128
          %146 = vsyncadd [#allocation6], %s145
          %s148 = sshll.u32 [#allocation5], 4
          %s149 = int_to_ptr.vmem [resolvable:$true] %s148
          %151 = dma.hbm_to_vmem [thread:$0]  %s1, 128, %s149, [#allocation6]
        $region16: #{tpu_custom_call.1} parent=11 // pred_fallthru
          _
        // Predicated region
        $region17: #{tpu_custom_call.1} parent=11 // pred_check
          %p152 = pneg %p98
        $region18: #{tpu_custom_call.1} parent=11 // pred_check_branch
          %154 = sbr.rel (%p152) target = $region20
        $region19: #{tpu_custom_call.1} parent=11 // pred_region
          %s156 = ssub.s32 128, 128
          %157 = vsyncadd [#allocation6], %s156
          %s159 = sshll.u32 [#allocation7], 4
          %s160 = int_to_ptr.vmem [resolvable:$true] %s159
          %162 = dma.hbm_to_vmem [thread:$0]  %s2, 128, %s160, [#allocation6]
        $region20: #{tpu_custom_call.1} parent=11 // pred_fallthru
          _
      $region12: #{tpu_custom_call.1} parent=5 // pred_fallthru
        _
      %p163 = scmp.lt.s32.totalorder %s16, 2
      // Predicated region
      $region21: #{tpu_custom_call.1} parent=5 // pred_check
        %p164 = pneg %p163
      $region22: #{tpu_custom_call.1} parent=5 // pred_check_branch
        %166 = sbr.rel (%p164) target = $region24
      $region23: #{tpu_custom_call.1} parent=5 // pred_region
        // Predicated region
        $region25: #{tpu_custom_call.1} parent=23 // pred_check
          %p167 = pneg %p50
        $region26: #{tpu_custom_call.1} parent=23 // pred_check_branch
          %169 = sbr.rel (%p167) target = $region28
        $region27: #{tpu_custom_call.1} parent=23 // pred_region
          %s170 = sand.u32 %s40, 1
          %s171 = scalar_lea.sflag [#allocation3], %s170
          %s172 = sand.u32 %s40, 1
          %s173 = smul.addr %s172, 8
          %s174 = scalar_lea.vmem [#allocation2], %s173
          %s175 = smul.u32 2, %s24
          %s177 = ssub.s32 128, 128
          %178 = vsyncadd %s171, %s177
          %s179 = smul.addr %s23, 2
          %s180 = sadd.s32 %s175, %s179
          %s181 = smul.addr %s180, 64
          %s182 = scalar_lea.hbm %s0, %s181
          %s184 = sshll.u32 %s174, 4
          %s185 = int_to_ptr.vmem [resolvable:$true] %s184
          %187 = dma.hbm_to_vmem [thread:$0]  %s182, 128, %s185, %s171
        $region28: #{tpu_custom_call.1} parent=23 // pred_fallthru
          _
      $region24: #{tpu_custom_call.1} parent=5 // pred_fallthru
        _
      %p188 = scmp.le.s32.totalorder 1, %s16
      %p189 = scmp.lt.s32.totalorder %s16, 3
      %p190 = pnand %p188, %p189
      %p191 = pneg %p190
      // Predicated region
      $region29: #{tpu_custom_call.1} parent=5 // pred_check
        _
      $region30: #{tpu_custom_call.1} parent=5 // pred_check_branch
        %193 = sbr.rel (%p190) target = $region32
      $region31: #{tpu_custom_call.1} parent=5 // pred_region
        %s194 = ssub.s32 %s16, 1
        %s195 = sand.u32 %s43, 1
        %s196 = scalar_lea.sflag [#allocation3], %s195
        %s197 = sand.u32 %s43, 1
        %s198 = smul.addr %s197, 8
        %s199 = scalar_lea.vmem [#allocation2], %s198
        // Predicated region
        $region33: #{tpu_custom_call.1} parent=31 // pred_check
          %p200 = pneg %p56
        $region34: #{tpu_custom_call.1} parent=31 // pred_check_branch
          %202 = sbr.rel (%p200) target = $region36
        $region35: #{tpu_custom_call.1} parent=31 // pred_region
          %203 = dma.done %s196, 128
        $region36: #{tpu_custom_call.1} parent=31 // pred_fallthru
          _
        // Predicated region
        $region37: #{tpu_custom_call.1} parent=31 // pred_check
          %p204 = pneg %p77
        $region38: #{tpu_custom_call.1} parent=31 // pred_check_branch
          %206 = sbr.rel (%p204) target = $region40
        $region39: #{tpu_custom_call.1} parent=31 // pred_region
          %207 = dma.done [#allocation6], 128
        $region40: #{tpu_custom_call.1} parent=31 // pred_fallthru
          _
        // Predicated region
        $region41: #{tpu_custom_call.1} parent=31 // pred_check
          %p208 = pneg %p98
        $region42: #{tpu_custom_call.1} parent=31 // pred_check_branch
          %210 = sbr.rel (%p208) target = $region44
        $region43: #{tpu_custom_call.1} parent=31 // pred_region
          %211 = dma.done [#allocation6], 128
        $region44: #{tpu_custom_call.1} parent=31 // pred_fallthru
          _
        %s212 = sand.u32 %s43, 1
        %s213 = scalar_lea.sflag [#allocation3], %s212
        %s214 = sand.u32 %s43, 1
        %s215 = smul.addr %s214, 8
        %s216 = scalar_lea.vmem [#allocation2], %s215
        %p217 = pneg %p56
        %p218 = pneg %p53
        %p219 = pneg %p77
        %p220 = pneg %p74
        %p221 = pneg %p98
        %p222 = pneg %p95
        %p223 = pneg %p126
        %p224 = pneg %p123
        %s225 = sand.u32 %s113, 1
        %s226 = scalar_lea.sflag [#allocation4], %s225
        %s227 = sand.u32 %s113, 1
        %s228 = smul.addr %s227, 8
        %s229 = scalar_lea.vmem [#allocation8], %s228
        %s230 = smul.u32 2, %s26
        %s231 = smul.u32 2, %s26
        %v232 = vld [vmem:[%s199] sm:$0xff]
        %v234 = vcombine.high %v232, %v232
        %vm236 = vcmask 1043456
        %v237 = vsel %vm236, %v232, 0.0
        %v238 = vrot.slane %v237, 4
        %v239 = vadd.f32 %v237, %v238
        %v240 = vrot.slane %v239, 2
        %v241 = vadd.f32 %v239, %v240
        %v242 = vrot.slane %v241, 1
        %v243 = vadd.f32 %v241, %v242
        %v244 = vsel %vm236, %v234, 0.0
        %v245 = vrot.slane %v244, 4
        %v246 = vadd.f32 %v244, %v245
        %v247 = vrot.slane %v246, 2
        %v248 = vadd.f32 %v246, %v247
        %v249 = vrot.slane %v248, 1
        %v250 = vadd.f32 %v248, %v249
        %v251 = vrcp.pop 4.0
        %v252 = vmul.f32 %v243, %v251
        %v253 = vmul.f32 %v250, %v251
        %v256 = vcombine.low %v252, %v253
        %v258 = vsub.f32 %v232, %v256
        %v259 = vmul.f32 %v258, %v258
        %v261 = vcombine.high %v259, %v259
        %v263 = vsel %vm236, %v259, 0.0
        %v264 = vrot.slane %v263, 4
        %v265 = vadd.f32 %v263, %v264
        %v266 = vrot.slane %v265, 2
        %v267 = vadd.f32 %v265, %v266
        %v268 = vrot.slane %v267, 1
        %v269 = vadd.f32 %v267, %v268
        %v270 = vsel %vm236, %v261, 0.0
        %v271 = vrot.slane %v270, 4
        %v272 = vadd.f32 %v270, %v271
        %v273 = vrot.slane %v272, 2
        %v274 = vadd.f32 %v272, %v273
        %v275 = vrot.slane %v274, 1
        %v276 = vadd.f32 %v274, %v275
        %v277 = vmul.f32 %v269, %v251
        %v278 = vmul.f32 %v276, %v251
        %v279 = vadd.f32 %v277, 1e-06
        %v280 = vadd.f32 %v278, 1e-06
        %v281 = vrsqrt.pop %v279
        %v282 = vrsqrt.pop %v280
        %v285 = vcombine.low %v281, %v282
        %v287 = vmul.f32 %v258, %v285
        %v288 = vld [vmem:[#allocation5] sm:$0xff]
        %v289 = vmul.f32 %v287, %v288
        %v290 = vld [vmem:[#allocation7] sm:$0xff]
        %v291 = vadd.f32 %v289, %v290
        %292 = vst [vmem:[%s229] sm:$0xff] %v291
        %s293 = sand.u32 %s113, 1
        %s294 = scalar_lea.sflag [#allocation4], %s293
        %s295 = sand.u32 %s113, 1
        %s296 = smul.addr %s295, 8
        %s297 = scalar_lea.vmem [#allocation8], %s296
        // Predicated region
        $region45: #{tpu_custom_call.1} parent=31 // pred_check
          %p298 = pneg %p123
        $region46: #{tpu_custom_call.1} parent=31 // pred_check_branch
          %300 = sbr.rel (%p298) target = $region48
        $region47: #{tpu_custom_call.1} parent=31 // pred_region
          %s301 = smul.u32 2, %s26
          %s303 = ssub.s32 128, 128
          %304 = vsyncadd %s294, %s303
          %s305 = smul.addr %s25, 2
          %s306 = sadd.s32 %s301, %s305
          %s307 = smul.addr %s306, 64
          %s308 = scalar_lea.hbm %s3, %s307
          %s310 = sshll.u32 %s297, 4
          %s311 = int_to_ptr.vmem [resolvable:$true] %s310
          %313 = dma.vmem_to_hbm [thread:$0]  %s311, 128, %s308, %s294
        $region48: #{tpu_custom_call.1} parent=31 // pred_fallthru
          _
      $region32: #{tpu_custom_call.1} parent=5 // pred_fallthru
        _
      %p314 = scmp.le.s32.totalorder 2, %s16
      // Predicated region
      $region49: #{tpu_custom_call.1} parent=5 // pred_check
        %p315 = pneg %p314
      $region50: #{tpu_custom_call.1} parent=5 // pred_check_branch
        %317 = sbr.rel (%p315) target = $region52
      $region51: #{tpu_custom_call.1} parent=5 // pred_region
        %s318 = ssub.s32 %s16, 2
        // Predicated region
        $region53: #{tpu_custom_call.1} parent=51 // pred_check
          %p319 = pneg %p129
        $region54: #{tpu_custom_call.1} parent=51 // pred_check_branch
          %321 = sbr.rel (%p319) target = $region56
        $region55: #{tpu_custom_call.1} parent=51 // pred_region
          %s322 = sand.u32 %s114, 1
          %s323 = scalar_lea.sflag [#allocation4], %s322
          %s324 = sand.u32 %s114, 1
          %s325 = smul.addr %s324, 8
          %s326 = scalar_lea.vmem [#allocation8], %s325
          %327 = dma.done %s323, 128
        $region56: #{tpu_custom_call.1} parent=51 // pred_fallthru
          _
      $region52: #{tpu_custom_call.1} parent=5 // pred_fallthru
        _
    $region6: #{tpu_custom_call.1} parent=1 // loop_footer
      %s20 = sadd.s32 1, %s16
    $region7: #{tpu_custom_call.1} parent=1 // loop_footer_branch
      %15 = sbr.rel target = $region3
    $region8: #{tpu_custom_call.1} parent=1 // loop_exit
      _
    %328 = vsyncpa [#allocation3], 1
    %s329 = scalar_lea.sflag [#allocation3], 1
    %330 = vsyncpa %s329, 1
    %331 = vsyncpa [#allocation6], 1
    %332 = vsyncpa [#allocation4], 1
    %s333 = scalar_lea.sflag [#allocation4], 1
    %334 = vsyncpa %s333, 1

</llo_original>
